<compile_context>
chip_gen: v5e
topology: v5e:2x2
jax: 0.10.0
libtpu: 0.0.40
codegen_flags: <defaults>
</compile_context>

<pallas_src>
import jax
import jax.numpy as jnp
from jax.experimental import pallas as pl
from jax.experimental.pallas import tpu as pltpu


def _pick_tile_n(n: int, c: int, itemsize: int, n_inputs: int, n_keys: int) -> int:
    """Pick the batch tile so the whole working set stays under a conservative
    VMEM budget on every TPU generation (v5e default scoped limit is 16 MiB;
    v7x has only 64 MiB physical per core).  Accounts for:
      * n_inputs tiles, double-buffered by the auto pipeline,
      * C padded up to a multiple of 128 lanes (real VMEM footprint),
      * the (n_keys, tile_n, 1) f32 accumulator (lane-padded to 128),
      * headroom for in-kernel f32 temporaries."""
    c_pad = max(128, ((c + 127) // 128) * 128)
    bytes_per_row = (
        2 * n_inputs * c_pad * itemsize   # double-buffered input tiles
        + n_keys * 128 * 4                # accumulator scratch (lane-padded)
        + 4 * c_pad * 4                   # headroom for f32 temporaries
    )
    budget = 12 * 1024 * 1024             # < 16 MiB default scoped VMEM on v5e
    cap = budget // bytes_per_row
    cap = max(16, (cap // 16) * 16)        # multiple of 16 (bf16 sublane packing)
    if n <= cap:
        return n                           # full dim -> no divisibility constraint
    return cap


def _make_ce_kernel(n_keys: int, tile_n: int, n_tiles_half: int,
                    n_rows: int, inv_n: float):
    def kernel(*refs):
        in_refs = refs[: 2 * n_keys]           # pre_0, lab_0, pre_1, lab_1, ...
        out_ref = refs[2 * n_keys]              # (1, 8, 128) tile for this batch half
        acc_ref = refs[2 * n_keys + 1]          # (n_keys, tile_n, 1) f32 VMEM scratch
        h = pl.program_id(0)                    # batch half (parallel axis)
        i = pl.program_id(1)                    # batch tile within the half (reduction)

        @pl.when(i == 0)
        def _():
            acc_ref[...] = jnp.zeros_like(acc_ref)

        # Nominal tile index for this grid point.  The index_map clamps the
        # actual block to stay in bounds; any clamped (duplicate) or
        # trailing-partial rows have nominal row_idx >= n_rows and are masked.
        t = h * n_tiles_half + i
        row_idx = t * tile_n + jax.lax.broadcasted_iota(jnp.int32, (tile_n, 1), 0)
        valid = row_idx < n_rows

        for k in range(n_keys):
            pre = in_refs[2 * k][...].astype(jnp.float32)       # (tile_n, C)
            lab = in_refs[2 * k + 1][...].astype(jnp.float32)   # (tile_n, C)

            # numerically stable row-wise logsumexp
            row_max = jnp.max(pre, axis=-1, keepdims=True)
            lse = jnp.log(jnp.sum(jnp.exp(pre - row_max), axis=-1,
                                  keepdims=True)) + row_max
            # CE with soft targets: lse * sum(lab) - sum(lab * pre)
            # (torch soft-target CE does NOT renormalize the labels)
            lab_sum = jnp.sum(lab, axis=-1, keepdims=True)
            dot = jnp.sum(lab * pre, axis=-1, keepdims=True)
            per_row = lse * lab_sum - dot                        # (tile_n, 1)

            # mask BEFORE accumulating (select semantics -> NaN/inf safe)
            acc_ref[k] += jnp.where(valid, per_row, 0.0)

        @pl.when(i == pl.num_programs(1) - 1)
        def _():
            # single cross-sublane reduce per key, lane-dense (8,128) output tile
            row = jax.lax.broadcasted_iota(jnp.int32, (8, 128), 0)
            out = jnp.zeros((8, 128), jnp.float32)
            for k in range(n_keys):
                # partial mean for this half: sum(rows in half) * (1 / global N)
                out = jnp.where(row == k, jnp.sum(acc_ref[k]) * inv_n, out)
            out_ref[0] = out

    return kernel


def fused_soft_ce(pres, labs, *, cast_to_bf16: bool = False) -> jax.Array:
    """Soft-label cross entropy (reduction='mean') for K same-shape keys.

    pres, labs: sequences of K arrays, each (N, C) logits / soft labels.
    Returns (K,) float32 losses.  One pallas_call, no stacking/copying of the
    inputs; optional bf16 cast at the boundary (math stays f32 in-kernel).
    """
    pres, labs = tuple(pres), tuple(labs)
    n_keys = len(pres)
    assert n_keys == len(labs) and 1 <= n_keys <= 8
    n, c = pres[0].shape
    for p, l in zip(pres, labs):
        assert p.shape == (n, c) and l.shape == (n, c)

    if cast_to_bf16:
        pres = tuple(p.astype(jnp.bfloat16) for p in pres)
        labs = tuple(l.astype(jnp.bfloat16) for l in labs)

    itemsize = jnp.dtype(pres[0].dtype).itemsize
    n_inputs = 2 * n_keys
    tile_n = _pick_tile_n(n, c, itemsize, n_inputs, n_keys)
    n_tiles_total = pl.cdiv(n, tile_n)
    n_tiles_half = pl.cdiv(n_tiles_total, 2)

    def row_map(h, i):
        # half h handles tiles [h*n_tiles_half, (h+1)*n_tiles_half); clamp the
        # (at most one) overshoot tile so the DMA stays in bounds -- its rows
        # are fully masked inside the kernel, so the duplicate data is harmless.
        t = jnp.minimum(h * n_tiles_half + i, n_tiles_total - 1)
        return (t, 0)

    in_specs, inputs = [], []
    for p, l in zip(pres, labs):
        in_specs.append(pl.BlockSpec((tile_n, c), row_map))
        inputs.append(p)
        in_specs.append(pl.BlockSpec((tile_n, c), row_map))
        inputs.append(l)

    kernel = _make_ce_kernel(n_keys, tile_n, n_tiles_half, n, 1.0 / n)

    out = pl.pallas_call(
        kernel,
        out_shape=jax.ShapeDtypeStruct((2, 8, 128), jnp.float32),
        grid_spec=pltpu.PrefetchScalarGridSpec(
            num_scalar_prefetch=0,
            grid=(2, n_tiles_half),
            in_specs=in_specs,
            out_specs=pl.BlockSpec((1, 8, 128), lambda h, i: (h, 0, 0)),
            scratch_shapes=[pltpu.VMEM((n_keys, tile_n, 1), jnp.float32)],
        ),
        compiler_params=pltpu.CompilerParams(
            # batch halves are independent -> balanced 2-way megacore split on
            # v7x; the batch-tile (reduction/accumulator) axis is last and
            # marked arbitrary.
            dimension_semantics=("parallel", "arbitrary"),
        ),
        cost_estimate=pl.CostEstimate(
            flops=5 * n_keys * n * c,
            transcendentals=n_keys * n * (c + 1),
            bytes_accessed=2 * n_keys * n * c * itemsize + 2 * 8 * 128 * 4,
        ),
    )(*inputs)

    # each half already holds (sum over its rows) / N -> add the halves.
    return out[0, :n_keys, 0] + out[1, :n_keys, 0]


class DiscreteSpherLoss:
    """JAX/Pallas port of SPEN DiscreteSpherLoss with loss_type='CE' (default)."""

    def __init__(self, loss_type: str = "CE", use_bf16_inputs: bool = False, **kwargs):
        if loss_type != "CE":
            # TODO(synk): only the default 'CE' branch is implemented in Pallas here
            # (L1 / KL / JS / Wasserstein variants are not ported).
            raise ValueError(f"Unsupported loss type in this port: {loss_type}")
        self.use_bf16_inputs = use_bf16_inputs  # opt-in: halves HBM traffic, perturbs logits

    def __call__(self, ori_pre_dict, ori_label_dict):
        names = ("r_encode", "theta_encode", "phi_encode")
        outs = ("r_loss", "theta_loss", "phi_loss")
        shapes = {tuple(ori_pre_dict[nm].shape) for nm in names}
        if len(shapes) == 1:
            # fused path: one pallas_call streaming all six (N, C) arrays directly
            losses = fused_soft_ce(
                [ori_pre_dict[nm] for nm in names],
                [ori_label_dict[nm] for nm in names],
                cast_to_bf16=self.use_bf16_inputs,
            )
            return {o: losses[idx] for idx, o in enumerate(outs)}
        # fallback when the three encodings have different bin counts
        return {
            o: fused_soft_ce([ori_pre_dict[nm]], [ori_label_dict[nm]],
                             cast_to_bf16=self.use_bf16_inputs)[0]
            for nm, o in zip(names, outs)
        }


if __name__ == "__main__":
    key = jax.random.PRNGKey(0)
    N = 8        # batch
    C = 64       # number of discrete bins per spherical coordinate

    keys = jax.random.split(key, 6)
    # predictions are raw logits; labels are soft (probability) encodings
    pre_dict = {
        "r_encode": jax.random.normal(keys[0], (N, C), dtype=jnp.float32),
        "theta_encode": jax.random.normal(keys[1], (N, C), dtype=jnp.float32),
        "phi_encode": jax.random.normal(keys[2], (N, C), dtype=jnp.float32),
    }
    label_dict = {
        "r_encode": jax.nn.softmax(jax.random.normal(keys[3], (N, C), dtype=jnp.float32), axis=-1),
        "theta_encode": jax.nn.softmax(jax.random.normal(keys[4], (N, C), dtype=jnp.float32), axis=-1),
        "phi_encode": jax.nn.softmax(jax.random.normal(keys[5], (N, C), dtype=jnp.float32), axis=-1),
    }

    loss_mod = DiscreteSpherLoss(loss_type="CE")
    out = loss_mod(pre_dict, label_dict)
    out = jax.tree_util.tree_map(jax.block_until_ready, out)

    # sanity check against a pure-JAX reference
    def ref_ce(pre, lab):
        logp = jax.nn.log_softmax(pre, axis=-1)
        return jnp.mean(-jnp.sum(lab * logp, axis=-1))

    for k_pre, k_out in [("r_encode", "r_loss"),
                         ("theta_encode", "theta_loss"),
                         ("phi_encode", "phi_loss")]:
        ref = ref_ce(pre_dict[k_pre], label_dict[k_pre])
        assert jnp.allclose(out[k_out], ref, rtol=1e-5, atol=1e-5), (k_out, out[k_out], ref)

    print("KERNEL_OK")
</pallas_src>

<mosaic_0001>
module attributes {stable_mosaic.version = 11 : i64} {
  func.func @kernel(%arg0: i32, %arg1: i32, %arg2: memref<8x64xf32, #tpu.memory_space<vmem>>, %arg3: memref<8x64xf32, #tpu.memory_space<vmem>>, %arg4: memref<8x64xf32, #tpu.memory_space<vmem>>, %arg5: memref<8x64xf32, #tpu.memory_space<vmem>>, %arg6: memref<8x64xf32, #tpu.memory_space<vmem>>, %arg7: memref<8x64xf32, #tpu.memory_space<vmem>>, %arg8: memref<1x8x128xf32, #tpu.memory_space<vmem>>, %arg9: memref<3x8x1xf32, #tpu.memory_space<vmem>>) attributes {dimension_semantics = [#tpu.dimension_semantics<parallel>, #tpu.dimension_semantics<arbitrary>], iteration_bounds = array<i64: 2, 1>, scalar_prefetch = 0 : i64, scratch_operands = 1 : i64, tpu.core_type = #tpu.core_type<tc>, window_params = [{transform_indices = @transform_0, window_bounds = array<i64: 8, 64>}, {transform_indices = @transform_1, window_bounds = array<i64: 8, 64>}, {transform_indices = @transform_2, window_bounds = array<i64: 8, 64>}, {transform_indices = @transform_3, window_bounds = array<i64: 8, 64>}, {transform_indices = @transform_4, window_bounds = array<i64: 8, 64>}, {transform_indices = @transform_5, window_bounds = array<i64: 8, 64>}, {transform_indices = @transform_6, window_bounds = array<i64: 1, 8, 128>}]} {
    %c0_i32 = arith.constant 0 : i32
    %0 = arith.cmpi eq, %arg1, %c0_i32 : i32
    %1 = arith.extui %0 : i1 to i32
    %c0_i32_0 = arith.constant 0 : i32
    %2 = arith.cmpi ne, %1, %c0_i32_0 : i32
    scf.if %2 {
      %cst_45 = arith.constant 0.000000e+00 : f32
      %92 = vector.broadcast %cst_45 : f32 to vector<3x8x1xf32>
      %c0_46 = arith.constant 0 : index
      %c0_47 = arith.constant 0 : index
      %c0_48 = arith.constant 0 : index
      %93 = vector.load %arg9[%c0_46, %c0_47, %c0_48] : memref<3x8x1xf32, #tpu.memory_space<vmem>>, vector<3x8x1xf32>
      tpu.vector_store %arg9[%c0_46, %c0_47, %c0_48], %92 {strides = array<i32>} : memref<3x8x1xf32, #tpu.memory_space<vmem>>, vector<3x8x1xf32>,
    } else {
    }
    %c1_i32 = arith.constant 1 : i32
    %3 = arith.muli %arg0, %c1_i32 : i32
    %4 = arith.addi %3, %arg1 : i32
    %c8_i32 = arith.constant 8 : i32
    %5 = arith.muli %4, %c8_i32 : i32
    %6 = tpu.iota {dimensions = array<i32: 0>} : vector<8x1xi32>
    %7 = vector.broadcast %5 : i32 to vector<8x1xi32>
    %8 = arith.addi %7, %6 : vector<8x1xi32>
    %c8_i32_1 = arith.constant 8 : i32
    %9 = vector.broadcast %c8_i32_1 : i32 to vector<8x1xi32>
    %10 = arith.cmpi slt, %8, %9 : vector<8x1xi32>
    %c0 = arith.constant 0 : index
    %c0_2 = arith.constant 0 : index
    %11 = vector.load %arg2[%c0, %c0_2] : memref<8x64xf32, #tpu.memory_space<vmem>>, vector<8x64xf32>
    %c0_3 = arith.constant 0 : index
    %c0_4 = arith.constant 0 : index
    %12 = vector.load %arg3[%c0_3, %c0_4] : memref<8x64xf32, #tpu.memory_space<vmem>>, vector<8x64xf32>
    %cst = arith.constant dense<0xFF800000> : vector<8xf32>
    %13 = vector.multi_reduction <maximumf>, %11, %cst [1] : vector<8x64xf32> to vector<8xf32>
    %14 = vector.shape_cast %13 : vector<8xf32> to vector<8x1xf32>
    %15 = vector.broadcast %14 : vector<8x1xf32> to vector<8x64xf32>
    %16 = arith.subf %11, %15 : vector<8x64xf32>
    %17 = math.exp %16 : vector<8x64xf32>
    %cst_5 = arith.constant dense<0.000000e+00> : vector<8xf32>
    %18 = vector.multi_reduction <add>, %17, %cst_5 [1] : vector<8x64xf32> to vector<8xf32>
    %19 = vector.shape_cast %18 : vector<8xf32> to vector<8x1xf32>
    %20 = math.log %19 : vector<8x1xf32>
    %21 = arith.addf %20, %14 : vector<8x1xf32>
    %cst_6 = arith.constant dense<0.000000e+00> : vector<8xf32>
    %22 = vector.multi_reduction <add>, %12, %cst_6 [1] : vector<8x64xf32> to vector<8xf32>
    %23 = vector.shape_cast %22 : vector<8xf32> to vector<8x1xf32>
    %24 = arith.mulf %12, %11 : vector<8x64xf32>
    %cst_7 = arith.constant dense<0.000000e+00> : vector<8xf32>
    %25 = vector.multi_reduction <add>, %24, %cst_7 [1] : vector<8x64xf32> to vector<8xf32>
    %26 = vector.shape_cast %25 : vector<8xf32> to vector<8x1xf32>
    %27 = arith.mulf %21, %23 : vector<8x1xf32>
    %28 = arith.subf %27, %26 : vector<8x1xf32>
    %c0_8 = arith.constant 0 : index
    %c0_9 = arith.constant 0 : index
    %c0_10 = arith.constant 0 : index
    %29 = vector.load %arg9[%c0_8, %c0_9, %c0_10] : memref<3x8x1xf32, #tpu.memory_space<vmem>>, vector<1x8x1xf32>
    %30 = vector.shape_cast %29 : vector<1x8x1xf32> to vector<8x1xf32>
    %cst_11 = arith.constant 0.000000e+00 : f32
    %31 = vector.broadcast %cst_11 : f32 to vector<8x1xf32>
    %32 = arith.select %10, %28, %31 : vector<8x1xi1>, vector<8x1xf32>
    %33 = arith.addf %30, %32 : vector<8x1xf32>
    %c0_12 = arith.constant 0 : index
    %c0_13 = arith.constant 0 : index
    %c0_14 = arith.constant 0 : index
    %34 = vector.load %arg9[%c0_12, %c0_13, %c0_14] : memref<3x8x1xf32, #tpu.memory_space<vmem>>, vector<1x8x1xf32>
    %35 = vector.shape_cast %34 : vector<1x8x1xf32> to vector<8x1xf32>
    %36 = vector.shape_cast %33 : vector<8x1xf32> to vector<1x8x1xf32>
    tpu.vector_store %arg9[%c0_12, %c0_13, %c0_14], %36 {strides = array<i32>} : memref<3x8x1xf32, #tpu.memory_space<vmem>>, vector<1x8x1xf32>,
    %c0_15 = arith.constant 0 : index
    %c0_16 = arith.constant 0 : index
    %37 = vector.load %arg4[%c0_15, %c0_16] : memref<8x64xf32, #tpu.memory_space<vmem>>, vector<8x64xf32>
    %c0_17 = arith.constant 0 : index
    %c0_18 = arith.constant 0 : index
    %38 = vector.load %arg5[%c0_17, %c0_18] : memref<8x64xf32, #tpu.memory_space<vmem>>, vector<8x64xf32>
    %cst_19 = arith.constant dense<0xFF800000> : vector<8xf32>
    %39 = vector.multi_reduction <maximumf>, %37, %cst_19 [1] : vector<8x64xf32> to vector<8xf32>
    %40 = vector.shape_cast %39 : vector<8xf32> to vector<8x1xf32>
    %41 = vector.broadcast %40 : vector<8x1xf32> to vector<8x64xf32>
    %42 = arith.subf %37, %41 : vector<8x64xf32>
    %43 = math.exp %42 : vector<8x64xf32>
    %cst_20 = arith.constant dense<0.000000e+00> : vector<8xf32>
    %44 = vector.multi_reduction <add>, %43, %cst_20 [1] : vector<8x64xf32> to vector<8xf32>
    %45 = vector.shape_cast %44 : vector<8xf32> to vector<8x1xf32>
    %46 = math.log %45 : vector<8x1xf32>
    %47 = arith.addf %46, %40 : vector<8x1xf32>
    %cst_21 = arith.constant dense<0.000000e+00> : vector<8xf32>
    %48 = vector.multi_reduction <add>, %38, %cst_21 [1] : vector<8x64xf32> to vector<8xf32>
    %49 = vector.shape_cast %48 : vector<8xf32> to vector<8x1xf32>
    %50 = arith.mulf %38, %37 : vector<8x64xf32>
    %cst_22 = arith.constant dense<0.000000e+00> : vector<8xf32>
    %51 = vector.multi_reduction <add>, %50, %cst_22 [1] : vector<8x64xf32> to vector<8xf32>
    %52 = vector.shape_cast %51 : vector<8xf32> to vector<8x1xf32>
    %53 = arith.mulf %47, %49 : vector<8x1xf32>
    %54 = arith.subf %53, %52 : vector<8x1xf32>
    %c1 = arith.constant 1 : index
    %c0_23 = arith.constant 0 : index
    %c0_24 = arith.constant 0 : index
    %55 = vector.load %arg9[%c1, %c0_23, %c0_24] : memref<3x8x1xf32, #tpu.memory_space<vmem>>, vector<1x8x1xf32>
    %56 = vector.shape_cast %55 : vector<1x8x1xf32> to vector<8x1xf32>
    %cst_25 = arith.constant 0.000000e+00 : f32
    %57 = vector.broadcast %cst_25 : f32 to vector<8x1xf32>
    %58 = arith.select %10, %54, %57 : vector<8x1xi1>, vector<8x1xf32>
    %59 = arith.addf %56, %58 : vector<8x1xf32>
    %c1_26 = arith.constant 1 : index
    %c0_27 = arith.constant 0 : index
    %c0_28 = arith.constant 0 : index
    %60 = vector.load %arg9[%c1_26, %c0_27, %c0_28] : memref<3x8x1xf32, #tpu.memory_space<vmem>>, vector<1x8x1xf32>
    %61 = vector.shape_cast %60 : vector<1x8x1xf32> to vector<8x1xf32>
    %62 = vector.shape_cast %59 : vector<8x1xf32> to vector<1x8x1xf32>
    tpu.vector_store %arg9[%c1_26, %c0_27, %c0_28], %62 {strides = array<i32>} : memref<3x8x1xf32, #tpu.memory_space<vmem>>, vector<1x8x1xf32>,
    %c0_29 = arith.constant 0 : index
    %c0_30 = arith.constant 0 : index
    %63 = vector.load %arg6[%c0_29, %c0_30] : memref<8x64xf32, #tpu.memory_space<vmem>>, vector<8x64xf32>
    %c0_31 = arith.constant 0 : index
    %c0_32 = arith.constant 0 : index
    %64 = vector.load %arg7[%c0_31, %c0_32] : memref<8x64xf32, #tpu.memory_space<vmem>>, vector<8x64xf32>
    %cst_33 = arith.constant dense<0xFF800000> : vector<8xf32>
    %65 = vector.multi_reduction <maximumf>, %63, %cst_33 [1] : vector<8x64xf32> to vector<8xf32>
    %66 = vector.shape_cast %65 : vector<8xf32> to vector<8x1xf32>
    %67 = vector.broadcast %66 : vector<8x1xf32> to vector<8x64xf32>
    %68 = arith.subf %63, %67 : vector<8x64xf32>
    %69 = math.exp %68 : vector<8x64xf32>
    %cst_34 = arith.constant dense<0.000000e+00> : vector<8xf32>
    %70 = vector.multi_reduction <add>, %69, %cst_34 [1] : vector<8x64xf32> to vector<8xf32>
    %71 = vector.shape_cast %70 : vector<8xf32> to vector<8x1xf32>
    %72 = math.log %71 : vector<8x1xf32>
    %73 = arith.addf %72, %66 : vector<8x1xf32>
    %cst_35 = arith.constant dense<0.000000e+00> : vector<8xf32>
    %74 = vector.multi_reduction <add>, %64, %cst_35 [1] : vector<8x64xf32> to vector<8xf32>
    %75 = vector.shape_cast %74 : vector<8xf32> to vector<8x1xf32>
    %76 = arith.mulf %64, %63 : vector<8x64xf32>
    %cst_36 = arith.constant dense<0.000000e+00> : vector<8xf32>
    %77 = vector.multi_reduction <add>, %76, %cst_36 [1] : vector<8x64xf32> to vector<8xf32>
    %78 = vector.shape_cast %77 : vector<8xf32> to vector<8x1xf32>
    %79 = arith.mulf %73, %75 : vector<8x1xf32>
    %80 = arith.subf %79, %78 : vector<8x1xf32>
    %c2 = arith.constant 2 : index
    %c0_37 = arith.constant 0 : index
    %c0_38 = arith.constant 0 : index
    %81 = vector.load %arg9[%c2, %c0_37, %c0_38] : memref<3x8x1xf32, #tpu.memory_space<vmem>>, vector<1x8x1xf32>
    %82 = vector.shape_cast %81 : vector<1x8x1xf32> to vector<8x1xf32>
    %cst_39 = arith.constant 0.000000e+00 : f32
    %83 = vector.broadcast %cst_39 : f32 to vector<8x1xf32>
    %84 = arith.select %10, %80, %83 : vector<8x1xi1>, vector<8x1xf32>
    %85 = arith.addf %82, %84 : vector<8x1xf32>
    %c2_40 = arith.constant 2 : index
    %c0_41 = arith.constant 0 : index
    %c0_42 = arith.constant 0 : index
    %86 = vector.load %arg9[%c2_40, %c0_41, %c0_42] : memref<3x8x1xf32, #tpu.memory_space<vmem>>, vector<1x8x1xf32>
    %87 = vector.shape_cast %86 : vector<1x8x1xf32> to vector<8x1xf32>
    %88 = vector.shape_cast %85 : vector<8x1xf32> to vector<1x8x1xf32>
    tpu.vector_store %arg9[%c2_40, %c0_41, %c0_42], %88 {strides = array<i32>} : memref<3x8x1xf32, #tpu.memory_space<vmem>>, vector<1x8x1xf32>,
    %c0_i32_43 = arith.constant 0 : i32
    %89 = arith.cmpi eq, %arg1, %c0_i32_43 : i32
    %90 = arith.extui %89 : i1 to i32
    %c0_i32_44 = arith.constant 0 : i32
    %91 = arith.cmpi ne, %90, %c0_i32_44 : i32
    scf.if %91 {
      %92 = tpu.iota {dimensions = array<i32: 0>} : vector<8x128xi32>
      %cst_45 = arith.constant 0.000000e+00 : f32
      %93 = vector.broadcast %cst_45 : f32 to vector<8x128xf32>
      %c0_i32_46 = arith.constant 0 : i32
      %94 = vector.broadcast %c0_i32_46 : i32 to vector<8x128xi32>
      %95 = arith.cmpi eq, %92, %94 : vector<8x128xi32>
      %c0_47 = arith.constant 0 : index
      %c0_48 = arith.constant 0 : index
      %c0_49 = arith.constant 0 : index
      %96 = vector.load %arg9[%c0_47, %c0_48, %c0_49] : memref<3x8x1xf32, #tpu.memory_space<vmem>>, vector<1x8x1xf32>
      %97 = vector.shape_cast %96 : vector<1x8x1xf32> to vector<8x1xf32>
      %98 = vector.shape_cast %97 : vector<8x1xf32> to vector<1x8x1xf32>
      %cst_50 = arith.constant dense<0.000000e+00> : vector<1xf32>
      %99 = vector.multi_reduction <add>, %98, %cst_50 [1, 2] : vector<1x8x1xf32> to vector<1xf32>
      %100 = vector.shape_cast %99 : vector<1xf32> to vector<1x1x1xf32>
      %101 = vector.extract %100[0, 0, 0] : f32 from vector<1x1x1xf32>
      %cst_51 = arith.constant 1.250000e-01 : f32
      %102 = arith.mulf %101, %cst_51 : f32
      %103 = vector.broadcast %102 : f32 to vector<8x128xf32>
      %104 = arith.select %95, %103, %93 : vector<8x128xi1>, vector<8x128xf32>
      %c1_i32_52 = arith.constant 1 : i32
      %105 = vector.broadcast %c1_i32_52 : i32 to vector<8x128xi32>
      %106 = arith.cmpi eq, %92, %105 : vector<8x128xi32>
      %c1_53 = arith.constant 1 : index
      %c0_54 = arith.constant 0 : index
      %c0_55 = arith.constant 0 : index
      %107 = vector.load %arg9[%c1_53, %c0_54, %c0_55] : memref<3x8x1xf32, #tpu.memory_space<vmem>>, vector<1x8x1xf32>
      %108 = vector.shape_cast %107 : vector<1x8x1xf32> to vector<8x1xf32>
      %109 = vector.shape_cast %108 : vector<8x1xf32> to vector<1x8x1xf32>
      %cst_56 = arith.constant dense<0.000000e+00> : vector<1xf32>
      %110 = vector.multi_reduction <add>, %109, %cst_56 [1, 2] : vector<1x8x1xf32> to vector<1xf32>
      %111 = vector.shape_cast %110 : vector<1xf32> to vector<1x1x1xf32>
      %112 = vector.extract %111[0, 0, 0] : f32 from vector<1x1x1xf32>
      %cst_57 = arith.constant 1.250000e-01 : f32
      %113 = arith.mulf %112, %cst_57 : f32
      %114 = vector.broadcast %113 : f32 to vector<8x128xf32>
      %115 = arith.select %106, %114, %104 : vector<8x128xi1>, vector<8x128xf32>
      %c2_i32 = arith.constant 2 : i32
      %116 = vector.broadcast %c2_i32 : i32 to vector<8x128xi32>
      %117 = arith.cmpi eq, %92, %116 : vector<8x128xi32>
      %c2_58 = arith.constant 2 : index
      %c0_59 = arith.constant 0 : index
      %c0_60 = arith.constant 0 : index
      %118 = vector.load %arg9[%c2_58, %c0_59, %c0_60] : memref<3x8x1xf32, #tpu.memory_space<vmem>>, vector<1x8x1xf32>
      %119 = vector.shape_cast %118 : vector<1x8x1xf32> to vector<8x1xf32>
      %120 = vector.shape_cast %119 : vector<8x1xf32> to vector<1x8x1xf32>
      %cst_61 = arith.constant dense<0.000000e+00> : vector<1xf32>
      %121 = vector.multi_reduction <add>, %120, %cst_61 [1, 2] : vector<1x8x1xf32> to vector<1xf32>
      %122 = vector.shape_cast %121 : vector<1xf32> to vector<1x1x1xf32>
      %123 = vector.extract %122[0, 0, 0] : f32 from vector<1x1x1xf32>
      %cst_62 = arith.constant 1.250000e-01 : f32
      %124 = arith.mulf %123, %cst_62 : f32
      %125 = vector.broadcast %124 : f32 to vector<8x128xf32>
      %126 = arith.select %117, %125, %115 : vector<8x128xi1>, vector<8x128xf32>
      %c0_63 = arith.constant 0 : index
      %c0_64 = arith.constant 0 : index
      %c0_65 = arith.constant 0 : index
      %127 = vector.load %arg8[%c0_63, %c0_64, %c0_65] : memref<1x8x128xf32, #tpu.memory_space<vmem>>, vector<1x8x128xf32>
      %128 = vector.shape_cast %127 : vector<1x8x128xf32> to vector<8x128xf32>
      %129 = vector.shape_cast %126 : vector<8x128xf32> to vector<1x8x128xf32>
      tpu.vector_store %arg8[%c0_63, %c0_64, %c0_65], %129 {strides = array<i32>} : memref<1x8x128xf32, #tpu.memory_space<vmem>>, vector<1x8x128xf32>,
    } else {
    }
    return
  }
  func.func @transform_0(%arg0: i32, %arg1: i32) -> (i32, i32) {
    %c1_i32 = arith.constant 1 : i32
    %0 = arith.muli %arg0, %c1_i32 : i32
    %1 = arith.addi %0, %arg1 : i32
    %c0_i32 = arith.constant 0 : i32
    %2 = arith.minsi %1, %c0_i32 : i32
    %c0_i32_0 = arith.constant 0 : i32
    %c0_i32_1 = arith.constant 0 : i32
    return %2, %c0_i32_0 : i32, i32
  }
  func.func @transform_1(%arg0: i32, %arg1: i32) -> (i32, i32) {
    %c1_i32 = arith.constant 1 : i32
    %0 = arith.muli %arg0, %c1_i32 : i32
    %1 = arith.addi %0, %arg1 : i32
    %c0_i32 = arith.constant 0 : i32
    %2 = arith.minsi %1, %c0_i32 : i32
    %c0_i32_0 = arith.constant 0 : i32
    %c0_i32_1 = arith.constant 0 : i32
    return %2, %c0_i32_0 : i32, i32
  }
  func.func @transform_2(%arg0: i32, %arg1: i32) -> (i32, i32) {
    %c1_i32 = arith.constant 1 : i32
    %0 = arith.muli %arg0, %c1_i32 : i32
    %1 = arith.addi %0, %arg1 : i32
    %c0_i32 = arith.constant 0 : i32
    %2 = arith.minsi %1, %c0_i32 : i32
    %c0_i32_0 = arith.constant 0 : i32
    %c0_i32_1 = arith.constant 0 : i32
    return %2, %c0_i32_0 : i32, i32
  }
  func.func @transform_3(%arg0: i32, %arg1: i32) -> (i32, i32) {
    %c1_i32 = arith.constant 1 : i32
    %0 = arith.muli %arg0, %c1_i32 : i32
    %1 = arith.addi %0, %arg1 : i32
    %c0_i32 = arith.constant 0 : i32
    %2 = arith.minsi %1, %c0_i32 : i32
    %c0_i32_0 = arith.constant 0 : i32
    %c0_i32_1 = arith.constant 0 : i32
    return %2, %c0_i32_0 : i32, i32
  }
  func.func @transform_4(%arg0: i32, %arg1: i32) -> (i32, i32) {
    %c1_i32 = arith.constant 1 : i32
    %0 = arith.muli %arg0, %c1_i32 : i32
    %1 = arith.addi %0, %arg1 : i32
    %c0_i32 = arith.constant 0 : i32
    %2 = arith.minsi %1, %c0_i32 : i32
    %c0_i32_0 = arith.constant 0 : i32
    %c0_i32_1 = arith.constant 0 : i32
    return %2, %c0_i32_0 : i32, i32
  }
  func.func @transform_5(%arg0: i32, %arg1: i32) -> (i32, i32) {
    %c1_i32 = arith.constant 1 : i32
    %0 = arith.muli %arg0, %c1_i32 : i32
    %1 = arith.addi %0, %arg1 : i32
    %c0_i32 = arith.constant 0 : i32
    %2 = arith.minsi %1, %c0_i32 : i32
    %c0_i32_0 = arith.constant 0 : i32
    %c0_i32_1 = arith.constant 0 : i32
    return %2, %c0_i32_0 : i32, i32
  }
  func.func @transform_6(%arg0: i32, %arg1: i32) -> (i32, i32, i32) {
    %c0_i32 = arith.constant 0 : i32
    %c0_i32_0 = arith.constant 0 : i32
    %c0_i32_1 = arith.constant 0 : i32
    return %arg0, %c0_i32, %c0_i32_0 : i32, i32, i32
  }
}

</mosaic_0001>

<llo_original>
// kernel: tpu_custom_call.1
$region0: #{tpu_custom_call.1}
  #allocation0 [shape = 'u32[]', space=smem, size = 0x4, offset = 0x4, fixed_abs, tag = 'smem constant byte address 0x4 - core index']
  #allocation1 [shape = 'u32[72,128]{1,0:T(1,128)}', space=vmem, size = 0x9000, scoped, tag = 'internal scratch']
  #allocation2 [shape = 'f32[3,8,1]{2,1,0:T(8,128)}', space=vmem, size = 0x3000, scoped, tag = 'scratch operand']
  %s0 = inlined_call_operand.hbm [shape: f32[8,64], index: 0, kind: input, shape index: {}]
  %s1 = inlined_call_operand.hbm [shape: f32[8,64], index: 1, kind: input, shape index: {}]
  %s2 = inlined_call_operand.hbm [shape: f32[8,64], index: 2, kind: input, shape index: {}]
  %s3 = inlined_call_operand.hbm [shape: f32[8,64], index: 3, kind: input, shape index: {}]
  %s4 = inlined_call_operand.hbm [shape: f32[8,64], index: 4, kind: input, shape index: {}]
  %s5 = inlined_call_operand.hbm [shape: f32[8,64], index: 5, kind: input, shape index: {}]
  %s6 = inlined_call_operand.hbm [shape: f32[2,8,128], index: 6, kind: output, shape index: {}]
  %s7 = sld [smem:[#allocation0]]
  $region89: #{tpu_custom_call.1} parent=0
    _
  %s9 = ssub.s32 1, %s7
  %s10 = scalar_select 0, %s9, %s7
  $region1: #{tpu_custom_call.1} parent=0
    #allocation3 [shape = 'u8[8192]{0}', space=vmem, size = 0x2000, scoped, tag = 'input window, operand 0']
    #allocation4 [shape = 's32[2]{0}', space=sflag, size = 0x8, scoped, tag = 'scoped memory for tpu_custom_call.1']
    #allocation5 [shape = 's32[2]{0}', space=sflag, size = 0x8, scoped, tag = 'scoped memory for tpu_custom_call.1']
    #allocation6 [shape = 'u8[8192]{0}', space=vmem, size = 0x2000, scoped, tag = 'input window, operand 1']
    #allocation7 [shape = 's32[2]{0}', space=sflag, size = 0x8, scoped, tag = 'scoped memory for tpu_custom_call.1']
    #allocation8 [shape = 'u8[8192]{0}', space=vmem, size = 0x2000, scoped, tag = 'input window, operand 2']
    #allocation9 [shape = 'u8[8192]{0}', space=vmem, size = 0x2000, scoped, tag = 'input window, operand 3']
    #allocation10 [shape = 's32[2]{0}', space=sflag, size = 0x8, scoped, tag = 'scoped memory for tpu_custom_call.1']
    #allocation11 [shape = 'u8[8192]{0}', space=vmem, size = 0x2000, scoped, tag = 'input window, operand 4']
    #allocation12 [shape = 'u8[8192]{0}', space=vmem, size = 0x2000, scoped, tag = 'input window, operand 5']
    #allocation13 [shape = 's32[2]{0}', space=sflag, size = 0x8, scoped, tag = 'scoped memory for tpu_custom_call.1']
    #allocation14 [shape = 'u8[8192]{0}', space=vmem, size = 0x2000, scoped, tag = 'output window, operand 0']
    %11 = vsyncpa [#allocation4], 0
    %s12 = scalar_lea.sflag [#allocation4], 1
    %13 = vsyncpa %s12, 0
    %14 = vsyncpa [#allocation7], 0
    %s15 = scalar_lea.sflag [#allocation7], 1
    %16 = vsyncpa %s15, 0
    %17 = vsyncpa [#allocation10], 0
    %s18 = scalar_lea.sflag [#allocation10], 1
    %19 = vsyncpa %s18, 0
    %20 = vsyncpa [#allocation13], 0
    %s21 = scalar_lea.sflag [#allocation13], 1
    %22 = vsyncpa %s21, 0
    %23 = vsyncpa [#allocation5], 0
    %s24 = scalar_lea.sflag [#allocation5], 1
    %25 = vsyncpa %s24, 0
    loop: start=0, step=1, limit=4
    $region2: #{tpu_custom_call.1} parent=1 // loop_pre_header
      _
    $region3: #{tpu_custom_call.1} parent=1 // loop_header
      %s27 = sphi 0, %s31
      %p28 = scmp.ge.s32.totalorder %s27, 4
      %s34 = sphi 0, %s46
      %s35 = sphi 0, %s42
      %s36 = sphi 0, %s34
      %s37 = sphi 0, %s35
      %s38 = sphi 0, %s36
      %s39 = sphi 0, %s37
      %s55 = sphi 0, %s57
      %s58 = sphi 0, %s55
      %s59 = sphi 0, %s58
      %s75 = sphi 0, %s59
      %s87 = sphi 0, %s89
      %s90 = sphi 0, %s87
      %s91 = sphi 0, %s90
      %s107 = sphi 0, %s91
      %s119 = sphi 0, %s121
      %s122 = sphi 0, %s119
      %s123 = sphi 0, %s122
      %s139 = sphi 0, %s123
      %s151 = sphi 0, %s153
      %s154 = sphi 0, %s151
      %s155 = sphi 0, %s154
      %s171 = sphi 0, %s155
      %s183 = sphi 0, %s185
      %s186 = sphi 0, %s183
      %s187 = sphi 0, %s186
      %s203 = sphi 0, %s187
      %s215 = sphi 0, %s217
      %s218 = sphi 0, %s215
      %s219 = sphi 0, %s218
      %s235 = sphi 0, %s219
      %s241 = sphi 0, %s243
      %s244 = sphi 0, %s241
      %s245 = sphi 0, %s244
      %s261 = sphi 0, %s245
    $region4: #{tpu_custom_call.1} parent=1 // loop_header_branch
      %30 = sbr.rel (%p28) target = $region8
    $region5: #{tpu_custom_call.1} parent=1 // loop_body
      %s32 = ssub.s32 %s27, 1
      %s33 = ssub.s32 %s27, 2
      %s40 = sadd.s32 1, %s35
      %p41 = scmp.ge.s32.totalorder %s40, 1
      %s42 = scalar_select %p41, 0, %s40
      %s43 = sadd.s32 1, %s34
      %s44 = scalar_select %p41, %s43, %s34
      %p45 = scmp.ge.s32.totalorder %s44, 2
      %s46 = scalar_select %p45, 0, %s44
      %s47 = sadd.s32 %s34, %s35
      %p48 = scmp.lt.s32.totalorder %s47, 0
      %s49 = scalar_select %p48, %s47, 0
      %s50 = sadd.s32 %s46, %s42
      %p51 = scmp.lt.s32.totalorder %s50, 0
      %s52 = scalar_select %p51, %s50, 0
      %s53 = ssub.s32 %s49, %s52
      %p54 = scmp.eq.s32.totalorder %s53, 0
      %s56 = sadd.s32 %s55, 1
      %s57 = scalar_select %p54, %s55, %s56
      %p60 = pneg %p54
      %p61 = scmp.eq.s32.totalorder %s27, 1
      %p62 = por %p60, %p61
      %p63 = scmp.ne.s32.totalorder %s55, %s58
      %p64 = scmp.eq.s32.totalorder %s27, 0
      %p65 = por %p63, %p64
      %p66 = scmp.ne.s32.totalorder %s55, %s58
      %p67 = scmp.eq.s32.totalorder %s32, 1
      %p68 = por %p66, %p67
      %p69 = scmp.ne.s32.totalorder %s58, %s59
      %p70 = scmp.eq.s32.totalorder %s32, 0
      %p71 = por %p69, %p70
      %p72 = scmp.ne.s32.totalorder %s58, %s59
      %p73 = scmp.eq.s32.totalorder %s33, 1
      %p74 = por %p72, %p73
      %p76 = scmp.ne.s32.totalorder %s59, %s75
      %p77 = scmp.eq.s32.totalorder %s33, 0
      %p78 = por %p76, %p77
      %s79 = sadd.s32 %s34, %s35
      %p80 = scmp.lt.s32.totalorder %s79, 0
      %s81 = scalar_select %p80, %s79, 0
      %s82 = sadd.s32 %s46, %s42
      %p83 = scmp.lt.s32.totalorder %s82, 0
      %s84 = scalar_select %p83, %s82, 0
      %s85 = ssub.s32 %s81, %s84
      %p86 = scmp.eq.s32.totalorder %s85, 0
      %s88 = sadd.s32 %s87, 1
      %s89 = scalar_select %p86, %s87, %s88
      %p92 = pneg %p86
      %p93 = scmp.eq.s32.totalorder %s27, 1
      %p94 = por %p92, %p93
      %p95 = scmp.ne.s32.totalorder %s87, %s90
      %p96 = scmp.eq.s32.totalorder %s27, 0
      %p97 = por %p95, %p96
      %p98 = scmp.ne.s32.totalorder %s87, %s90
      %p99 = scmp.eq.s32.totalorder %s32, 1
      %p100 = por %p98, %p99
      %p101 = scmp.ne.s32.totalorder %s90, %s91
      %p102 = scmp.eq.s32.totalorder %s32, 0
      %p103 = por %p101, %p102
      %p104 = scmp.ne.s32.totalorder %s90, %s91
      %p105 = scmp.eq.s32.totalorder %s33, 1
      %p106 = por %p104, %p105
      %p108 = scmp.ne.s32.totalorder %s91, %s107
      %p109 = scmp.eq.s32.totalorder %s33, 0
      %p110 = por %p108, %p109
      %s111 = sadd.s32 %s34, %s35
      %p112 = scmp.lt.s32.totalorder %s111, 0
      %s113 = scalar_select %p112, %s111, 0
      %s114 = sadd.s32 %s46, %s42
      %p115 = scmp.lt.s32.totalorder %s114, 0
      %s116 = scalar_select %p115, %s114, 0
      %s117 = ssub.s32 %s113, %s116
      %p118 = scmp.eq.s32.totalorder %s117, 0
      %s120 = sadd.s32 %s119, 1
      %s121 = scalar_select %p118, %s119, %s120
      %p124 = pneg %p118
      %p125 = scmp.eq.s32.totalorder %s27, 1
      %p126 = por %p124, %p125
      %p127 = scmp.ne.s32.totalorder %s119, %s122
      %p128 = scmp.eq.s32.totalorder %s27, 0
      %p129 = por %p127, %p128
      %p130 = scmp.ne.s32.totalorder %s119, %s122
      %p131 = scmp.eq.s32.totalorder %s32, 1
      %p132 = por %p130, %p131
      %p133 = scmp.ne.s32.totalorder %s122, %s123
      %p134 = scmp.eq.s32.totalorder %s32, 0
      %p135 = por %p133, %p134
      %p136 = scmp.ne.s32.totalorder %s122, %s123
      %p137 = scmp.eq.s32.totalorder %s33, 1
      %p138 = por %p136, %p137
      %p140 = scmp.ne.s32.totalorder %s123, %s139
      %p141 = scmp.eq.s32.totalorder %s33, 0
      %p142 = por %p140, %p141
      %s143 = sadd.s32 %s34, %s35
      %p144 = scmp.lt.s32.totalorder %s143, 0
      %s145 = scalar_select %p144, %s143, 0
      %s146 = sadd.s32 %s46, %s42
      %p147 = scmp.lt.s32.totalorder %s146, 0
      %s148 = scalar_select %p147, %s146, 0
      %s149 = ssub.s32 %s145, %s148
      %p150 = scmp.eq.s32.totalorder %s149, 0
      %s152 = sadd.s32 %s151, 1
      %s153 = scalar_select %p150, %s151, %s152
      %p156 = pneg %p150
      %p157 = scmp.eq.s32.totalorder %s27, 1
      %p158 = por %p156, %p157
      %p159 = scmp.ne.s32.totalorder %s151, %s154
      %p160 = scmp.eq.s32.totalorder %s27, 0
      %p161 = por %p159, %p160
      %p162 = scmp.ne.s32.totalorder %s151, %s154
      %p163 = scmp.eq.s32.totalorder %s32, 1
      %p164 = por %p162, %p163
      %p165 = scmp.ne.s32.totalorder %s154, %s155
      %p166 = scmp.eq.s32.totalorder %s32, 0
      %p167 = por %p165, %p166
      %p168 = scmp.ne.s32.totalorder %s154, %s155
      %p169 = scmp.eq.s32.totalorder %s33, 1
      %p170 = por %p168, %p169
      %p172 = scmp.ne.s32.totalorder %s155, %s171
      %p173 = scmp.eq.s32.totalorder %s33, 0
      %p174 = por %p172, %p173
      %s175 = sadd.s32 %s34, %s35
      %p176 = scmp.lt.s32.totalorder %s175, 0
      %s177 = scalar_select %p176, %s175, 0
      %s178 = sadd.s32 %s46, %s42
      %p179 = scmp.lt.s32.totalorder %s178, 0
      %s180 = scalar_select %p179, %s178, 0
      %s181 = ssub.s32 %s177, %s180
      %p182 = scmp.eq.s32.totalorder %s181, 0
      %s184 = sadd.s32 %s183, 1
      %s185 = scalar_select %p182, %s183, %s184
      %p188 = pneg %p182
      %p189 = scmp.eq.s32.totalorder %s27, 1
      %p190 = por %p188, %p189
      %p191 = scmp.ne.s32.totalorder %s183, %s186
      %p192 = scmp.eq.s32.totalorder %s27, 0
      %p193 = por %p191, %p192
      %p194 = scmp.ne.s32.totalorder %s183, %s186
      %p195 = scmp.eq.s32.totalorder %s32, 1
      %p196 = por %p194, %p195
      %p197 = scmp.ne.s32.totalorder %s186, %s187
      %p198 = scmp.eq.s32.totalorder %s32, 0
      %p199 = por %p197, %p198
      %p200 = scmp.ne.s32.totalorder %s186, %s187
      %p201 = scmp.eq.s32.totalorder %s33, 1
      %p202 = por %p200, %p201
      %p204 = scmp.ne.s32.totalorder %s187, %s203
      %p205 = scmp.eq.s32.totalorder %s33, 0
      %p206 = por %p204, %p205
      %s207 = sadd.s32 %s34, %s35
      %p208 = scmp.lt.s32.totalorder %s207, 0
      %s209 = scalar_select %p208, %s207, 0
      %s210 = sadd.s32 %s46, %s42
      %p211 = scmp.lt.s32.totalorder %s210, 0
      %s212 = scalar_select %p211, %s210, 0
      %s213 = ssub.s32 %s209, %s212
      %p214 = scmp.eq.s32.totalorder %s213, 0
      %s216 = sadd.s32 %s215, 1
      %s217 = scalar_select %p214, %s215, %s216
      %p220 = pneg %p214
      %p221 = scmp.eq.s32.totalorder %s27, 1
      %p222 = por %p220, %p221
      %p223 = scmp.ne.s32.totalorder %s215, %s218
      %p224 = scmp.eq.s32.totalorder %s27, 0
      %p225 = por %p223, %p224
      %p226 = scmp.ne.s32.totalorder %s215, %s218
      %p227 = scmp.eq.s32.totalorder %s32, 1
      %p228 = por %p226, %p227
      %p229 = scmp.ne.s32.totalorder %s218, %s219
      %p230 = scmp.eq.s32.totalorder %s32, 0
      %p231 = por %p229, %p230
      %p232 = scmp.ne.s32.totalorder %s218, %s219
      %p233 = scmp.eq.s32.totalorder %s33, 1
      %p234 = por %p232, %p233
      %p236 = scmp.ne.s32.totalorder %s219, %s235
      %p237 = scmp.eq.s32.totalorder %s33, 0
      %p238 = por %p236, %p237
      %s239 = ssub.s32 %s34, %s46
      %p240 = scmp.eq.s32.totalorder %s239, 0
      %s242 = sadd.s32 %s241, 1
      %s243 = scalar_select %p240, %s241, %s242
      %p246 = pneg %p240
      %p247 = scmp.eq.s32.totalorder %s27, 1
      %p248 = por %p246, %p247
      %p249 = scmp.ne.s32.totalorder %s241, %s244
      %p250 = scmp.eq.s32.totalorder %s27, 0
      %p251 = por %p249, %p250
      %p252 = scmp.ne.s32.totalorder %s241, %s244
      %p253 = scmp.eq.s32.totalorder %s32, 1
      %p254 = por %p252, %p253
      %p255 = scmp.ne.s32.totalorder %s244, %s245
      %p256 = scmp.eq.s32.totalorder %s32, 0
      %p257 = por %p255, %p256
      %p258 = scmp.ne.s32.totalorder %s244, %s245
      %p259 = scmp.eq.s32.totalorder %s33, 1
      %p260 = por %p258, %p259
      %p262 = scmp.ne.s32.totalorder %s245, %s261
      %p263 = scmp.eq.s32.totalorder %s33, 0
      %p264 = por %p262, %p263
      %p265 = scmp.le.s32.totalorder 1, %s27
      %p266 = scmp.lt.s32.totalorder %s27, 3
      %p267 = pnand %p265, %p266
      %p268 = pneg %p267
      // Predicated region
      $region9: #{tpu_custom_call.1} parent=5 // pred_check
        _
      $region10: #{tpu_custom_call.1} parent=5 // pred_check_branch
        %270 = sbr.rel (%p267) target = $region12
      $region11: #{tpu_custom_call.1} parent=5 // pred_region
        %s271 = ssub.s32 %s27, 1
      $region12: #{tpu_custom_call.1} parent=5 // pred_fallthru
        _
      %p272 = scmp.lt.s32.totalorder %s27, 2
      // Predicated region
      $region13: #{tpu_custom_call.1} parent=5 // pred_check
        %p273 = pneg %p272
      $region14: #{tpu_custom_call.1} parent=5 // pred_check_branch
        %275 = sbr.rel (%p273) target = $region16
      $region15: #{tpu_custom_call.1} parent=5 // pred_region
        // Predicated region
        $region17: #{tpu_custom_call.1} parent=15 // pred_check
          %p276 = pneg %p65
        $region18: #{tpu_custom_call.1} parent=15 // pred_check_branch
          %278 = sbr.rel (%p276) target = $region20
        $region19: #{tpu_custom_call.1} parent=15 // pred_region
          %s279 = sand.u32 %s55, 1
          %s280 = scalar_lea.sflag [#allocation4], %s279
          %s281 = sand.u32 %s55, 1
          %s282 = smul.addr %s281, 8
          %s283 = scalar_lea.vmem [#allocation3], %s282
          %s284 = sadd.s32 %s34, %s35
          %p285 = scmp.lt.s32.totalorder %s284, 0
          %s286 = scalar_select %p285, %s284, 0
          %288 = vsyncadd %s280, 0
          %s289 = smul.addr %s286, 8
          %s290 = scalar_lea.hbm %s0, %s289
          %s292 = sshll.u32 %s290, 4
          %s293 = int_to_ptr.hbm [resolvable:$true] %s292
          %s294 = sshll.u32 %s283, 4
          %s295 = int_to_ptr.vmem [resolvable:$true] %s294
          %297 = dma.hbm_to_vmem [thread:$0]  %s293, 128, %s295, %s280
        $region20: #{tpu_custom_call.1} parent=15 // pred_fallthru
          _
        // Predicated region
        $region21: #{tpu_custom_call.1} parent=15 // pred_check
          %p298 = pneg %p97
        $region22: #{tpu_custom_call.1} parent=15 // pred_check_branch
          %300 = sbr.rel (%p298) target = $region24
        $region23: #{tpu_custom_call.1} parent=15 // pred_region
          %s301 = sand.u32 %s27, 1
          %s302 = scalar_lea.sflag [#allocation7], %s301
          %s303 = sand.u32 %s87, 1
          %s304 = smul.addr %s303, 8
          %s305 = scalar_lea.vmem [#allocation6], %s304
          %s306 = sadd.s32 %s34, %s35
          %p307 = scmp.lt.s32.totalorder %s306, 0
          %s308 = scalar_select %p307, %s306, 0
          %310 = vsyncadd %s302, 0
          %s311 = smul.addr %s308, 8
          %s312 = scalar_lea.hbm %s1, %s311
          %s314 = sshll.u32 %s312, 4
          %s315 = int_to_ptr.hbm [resolvable:$true] %s314
          %s316 = sshll.u32 %s305, 4
          %s317 = int_to_ptr.vmem [resolvable:$true] %s316
          %319 = dma.hbm_to_vmem [thread:$0]  %s315, 128, %s317, %s302
        $region24: #{tpu_custom_call.1} parent=15 // pred_fallthru
          _
        // Predicated region
        $region25: #{tpu_custom_call.1} parent=15 // pred_check
          %p320 = pneg %p129
        $region26: #{tpu_custom_call.1} parent=15 // pred_check_branch
          %322 = sbr.rel (%p320) target = $region28
        $region27: #{tpu_custom_call.1} parent=15 // pred_region
          %s323 = sand.u32 %s27, 1
          %s324 = scalar_lea.sflag [#allocation7], %s323
          %s325 = sand.u32 %s119, 1
          %s326 = smul.addr %s325, 8
          %s327 = scalar_lea.vmem [#allocation8], %s326
          %s328 = sadd.s32 %s34, %s35
          %p329 = scmp.lt.s32.totalorder %s328, 0
          %s330 = scalar_select %p329, %s328, 0
          %332 = vsyncadd %s324, 0
          %s333 = smul.addr %s330, 8
          %s334 = scalar_lea.hbm %s2, %s333
          %s336 = sshll.u32 %s334, 4
          %s337 = int_to_ptr.hbm [resolvable:$true] %s336
          %s338 = sshll.u32 %s327, 4
          %s339 = int_to_ptr.vmem [resolvable:$true] %s338
          %341 = dma.hbm_to_vmem [thread:$0]  %s337, 128, %s339, %s324
        $region28: #{tpu_custom_call.1} parent=15 // pred_fallthru
          _
        // Predicated region
        $region29: #{tpu_custom_call.1} parent=15 // pred_check
          %p342 = pneg %p161
        $region30: #{tpu_custom_call.1} parent=15 // pred_check_branch
          %344 = sbr.rel (%p342) target = $region32
        $region31: #{tpu_custom_call.1} parent=15 // pred_region
          %s345 = sand.u32 %s27, 1
          %s346 = scalar_lea.sflag [#allocation10], %s345
          %s347 = sand.u32 %s151, 1
          %s348 = smul.addr %s347, 8
          %s349 = scalar_lea.vmem [#allocation9], %s348
          %s350 = sadd.s32 %s34, %s35
          %p351 = scmp.lt.s32.totalorder %s350, 0
          %s352 = scalar_select %p351, %s350, 0
          %354 = vsyncadd %s346, 0
          %s355 = smul.addr %s352, 8
          %s356 = scalar_lea.hbm %s3, %s355
          %s358 = sshll.u32 %s356, 4
          %s359 = int_to_ptr.hbm [resolvable:$true] %s358
          %s360 = sshll.u32 %s349, 4
          %s361 = int_to_ptr.vmem [resolvable:$true] %s360
          %363 = dma.hbm_to_vmem [thread:$0]  %s359, 128, %s361, %s346
        $region32: #{tpu_custom_call.1} parent=15 // pred_fallthru
          _
        // Predicated region
        $region33: #{tpu_custom_call.1} parent=15 // pred_check
          %p364 = pneg %p193
        $region34: #{tpu_custom_call.1} parent=15 // pred_check_branch
          %366 = sbr.rel (%p364) target = $region36
        $region35: #{tpu_custom_call.1} parent=15 // pred_region
          %s367 = sand.u32 %s27, 1
          %s368 = scalar_lea.sflag [#allocation10], %s367
          %s369 = sand.u32 %s183, 1
          %s370 = smul.addr %s369, 8
          %s371 = scalar_lea.vmem [#allocation11], %s370
          %s372 = sadd.s32 %s34, %s35
          %p373 = scmp.lt.s32.totalorder %s372, 0
          %s374 = scalar_select %p373, %s372, 0
          %376 = vsyncadd %s368, 0
          %s377 = smul.addr %s374, 8
          %s378 = scalar_lea.hbm %s4, %s377
          %s380 = sshll.u32 %s378, 4
          %s381 = int_to_ptr.hbm [resolvable:$true] %s380
          %s382 = sshll.u32 %s371, 4
          %s383 = int_to_ptr.vmem [resolvable:$true] %s382
          %385 = dma.hbm_to_vmem [thread:$0]  %s381, 128, %s383, %s368
        $region36: #{tpu_custom_call.1} parent=15 // pred_fallthru
          _
        // Predicated region
        $region37: #{tpu_custom_call.1} parent=15 // pred_check
          %p386 = pneg %p225
        $region38: #{tpu_custom_call.1} parent=15 // pred_check_branch
          %388 = sbr.rel (%p386) target = $region40
        $region39: #{tpu_custom_call.1} parent=15 // pred_region
          %s389 = sand.u32 %s215, 1
          %s390 = scalar_lea.sflag [#allocation13], %s389
          %s391 = sand.u32 %s215, 1
          %s392 = smul.addr %s391, 8
          %s393 = scalar_lea.vmem [#allocation12], %s392
          %s394 = sadd.s32 %s34, %s35
          %p395 = scmp.lt.s32.totalorder %s394, 0
          %s396 = scalar_select %p395, %s394, 0
          %398 = vsyncadd %s390, 0
          %s399 = smul.addr %s396, 8
          %s400 = scalar_lea.hbm %s5, %s399
          %s402 = sshll.u32 %s400, 4
          %s403 = int_to_ptr.hbm [resolvable:$true] %s402
          %s404 = sshll.u32 %s393, 4
          %s405 = int_to_ptr.vmem [resolvable:$true] %s404
          %407 = dma.hbm_to_vmem [thread:$0]  %s403, 128, %s405, %s390
        $region40: #{tpu_custom_call.1} parent=15 // pred_fallthru
          _
      $region16: #{tpu_custom_call.1} parent=5 // pred_fallthru
        _
      %p408 = scmp.le.s32.totalorder 1, %s27
      %p409 = scmp.lt.s32.totalorder %s27, 3
      %p410 = pnand %p408, %p409
      %p411 = pneg %p410
      // Predicated region
      $region41: #{tpu_custom_call.1} parent=5 // pred_check
        _
      $region42: #{tpu_custom_call.1} parent=5 // pred_check_branch
        %413 = sbr.rel (%p410) target = $region44
      $region43: #{tpu_custom_call.1} parent=5 // pred_region
        %s414 = ssub.s32 %s27, 1
        %s415 = sand.u32 %s58, 1
        %s416 = scalar_lea.sflag [#allocation4], %s415
        %s417 = sand.u32 %s58, 1
        %s418 = smul.addr %s417, 8
        %s419 = scalar_lea.vmem [#allocation3], %s418
        // Predicated region
        $region45: #{tpu_custom_call.1} parent=43 // pred_check
          %p420 = pneg %p71
        $region46: #{tpu_custom_call.1} parent=43 // pred_check_branch
          %422 = sbr.rel (%p420) target = $region48
        $region47: #{tpu_custom_call.1} parent=43 // pred_region
          %424 = dma.done %s416, 128
        $region48: #{tpu_custom_call.1} parent=43 // pred_fallthru
          _
        %s425 = sand.u32 %s32, 1
        %s426 = scalar_lea.sflag [#allocation7], %s425
        %s427 = sand.u32 %s90, 1
        %s428 = smul.addr %s427, 8
        %s429 = scalar_lea.vmem [#allocation6], %s428
        // Predicated region
        $region49: #{tpu_custom_call.1} parent=43 // pred_check
          %p430 = pneg %p103
        $region50: #{tpu_custom_call.1} parent=43 // pred_check_branch
          %432 = sbr.rel (%p430) target = $region52
        $region51: #{tpu_custom_call.1} parent=43 // pred_region
          %434 = dma.done %s426, 128
        $region52: #{tpu_custom_call.1} parent=43 // pred_fallthru
          _
        %s435 = sand.u32 %s32, 1
        %s436 = scalar_lea.sflag [#allocation7], %s435
        %s437 = sand.u32 %s122, 1
        %s438 = smul.addr %s437, 8
        %s439 = scalar_lea.vmem [#allocation8], %s438
        // Predicated region
        $region53: #{tpu_custom_call.1} parent=43 // pred_check
          %p440 = pneg %p135
        $region54: #{tpu_custom_call.1} parent=43 // pred_check_branch
          %442 = sbr.rel (%p440) target = $region56
        $region55: #{tpu_custom_call.1} parent=43 // pred_region
          %444 = dma.done %s436, 128
        $region56: #{tpu_custom_call.1} parent=43 // pred_fallthru
          _
        %s445 = sand.u32 %s32, 1
        %s446 = scalar_lea.sflag [#allocation10], %s445
        %s447 = sand.u32 %s154, 1
        %s448 = smul.addr %s447, 8
        %s449 = scalar_lea.vmem [#allocation9], %s448
        // Predicated region
        $region57: #{tpu_custom_call.1} parent=43 // pred_check
          %p450 = pneg %p167
        $region58: #{tpu_custom_call.1} parent=43 // pred_check_branch
          %452 = sbr.rel (%p450) target = $region60
        $region59: #{tpu_custom_call.1} parent=43 // pred_region
          %454 = dma.done %s446, 128
        $region60: #{tpu_custom_call.1} parent=43 // pred_fallthru
          _
        %s455 = sand.u32 %s32, 1
        %s456 = scalar_lea.sflag [#allocation10], %s455
        %s457 = sand.u32 %s186, 1
        %s458 = smul.addr %s457, 8
        %s459 = scalar_lea.vmem [#allocation11], %s458
        // Predicated region
        $region61: #{tpu_custom_call.1} parent=43 // pred_check
          %p460 = pneg %p199
        $region62: #{tpu_custom_call.1} parent=43 // pred_check_branch
          %462 = sbr.rel (%p460) target = $region64
        $region63: #{tpu_custom_call.1} parent=43 // pred_region
          %464 = dma.done %s456, 128
        $region64: #{tpu_custom_call.1} parent=43 // pred_fallthru
          _
        %s465 = sand.u32 %s218, 1
        %s466 = scalar_lea.sflag [#allocation13], %s465
        %s467 = sand.u32 %s218, 1
        %s468 = smul.addr %s467, 8
        %s469 = scalar_lea.vmem [#allocation12], %s468
        // Predicated region
        $region65: #{tpu_custom_call.1} parent=43 // pred_check
          %p470 = pneg %p231
        $region66: #{tpu_custom_call.1} parent=43 // pred_check_branch
          %472 = sbr.rel (%p470) target = $region68
        $region67: #{tpu_custom_call.1} parent=43 // pred_region
          %474 = dma.done %s466, 128
        $region68: #{tpu_custom_call.1} parent=43 // pred_fallthru
          _
        %s475 = sand.u32 %s58, 1
        %s476 = scalar_lea.sflag [#allocation4], %s475
        %s477 = sand.u32 %s58, 1
        %s478 = smul.addr %s477, 8
        %s479 = scalar_lea.vmem [#allocation3], %s478
        %p480 = pneg %p71
        %p481 = pneg %p68
        %s482 = sand.u32 %s32, 1
        %s483 = scalar_lea.sflag [#allocation7], %s482
        %s484 = sand.u32 %s90, 1
        %s485 = smul.addr %s484, 8
        %s486 = scalar_lea.vmem [#allocation6], %s485
        %p487 = pneg %p103
        %p488 = pneg %p100
        %s489 = sand.u32 %s32, 1
        %s490 = scalar_lea.sflag [#allocation7], %s489
        %s491 = sand.u32 %s122, 1
        %s492 = smul.addr %s491, 8
        %s493 = scalar_lea.vmem [#allocation8], %s492
        %p494 = pneg %p135
        %p495 = pneg %p132
        %s496 = sand.u32 %s32, 1
        %s497 = scalar_lea.sflag [#allocation10], %s496
        %s498 = sand.u32 %s154, 1
        %s499 = smul.addr %s498, 8
        %s500 = scalar_lea.vmem [#allocation9], %s499
        %p501 = pneg %p167
        %p502 = pneg %p164
        %s503 = sand.u32 %s32, 1
        %s504 = scalar_lea.sflag [#allocation10], %s503
        %s505 = sand.u32 %s186, 1
        %s506 = smul.addr %s505, 8
        %s507 = scalar_lea.vmem [#allocation11], %s506
        %p508 = pneg %p199
        %p509 = pneg %p196
        %s510 = sand.u32 %s218, 1
        %s511 = scalar_lea.sflag [#allocation13], %s510
        %s512 = sand.u32 %s218, 1
        %s513 = smul.addr %s512, 8
        %s514 = scalar_lea.vmem [#allocation12], %s513
        %p515 = pneg %p231
        %p516 = pneg %p228
        %p517 = pneg %p257
        %p518 = pneg %p254
        %s519 = sand.u32 %s244, 1
        %s520 = scalar_lea.sflag [#allocation5], %s519
        %s521 = sand.u32 %s244, 1
        %s522 = smul.addr %s521, 8
        %s523 = scalar_lea.vmem [#allocation14], %s522
        %s524 = sadd.s32 %s36, %s37
        %p525 = scmp.lt.s32.totalorder %s524, 0
        %s526 = scalar_select %p525, %s524, 0
        %s527 = sadd.s32 %s36, %s37
        %p528 = scmp.lt.s32.totalorder %s527, 0
        %s529 = scalar_select %p528, %s527, 0
        %s530 = sadd.s32 %s36, %s37
        %p531 = scmp.lt.s32.totalorder %s530, 0
        %s532 = scalar_select %p531, %s530, 0
        %s533 = sadd.s32 %s36, %s37
        %p534 = scmp.lt.s32.totalorder %s533, 0
        %s535 = scalar_select %p534, %s533, 0
        %s536 = sadd.s32 %s36, %s37
        %p537 = scmp.lt.s32.totalorder %s536, 0
        %s538 = scalar_select %p537, %s536, 0
        %s539 = sadd.s32 %s36, %s37
        %p540 = scmp.lt.s32.totalorder %s539, 0
        %s541 = scalar_select %p540, %s539, 0
        %p542 = scmp.eq.s32.totalorder %s37, 0
        // Predicated region
        $region69: #{tpu_custom_call.1} parent=43 // pred_check
          %p543 = pneg %p542
        $region70: #{tpu_custom_call.1} parent=43 // pred_check_branch
          %545 = sbr.rel (%p543) target = $region72
        $region71: #{tpu_custom_call.1} parent=43 // pred_region
          %vm546 = vcmask 7168
          %547 = vst.msk [vmem:[#allocation2] sm:$0xff] %vm546, 0.0
          %548 = vst.msk [vmem:[#allocation2 + $0x8] sm:$0xff] %vm546, 0.0
          %549 = vst.msk [vmem:[#allocation2 + $0x10] sm:$0xff] %vm546, 0.0
        $region72: #{tpu_custom_call.1} parent=43 // pred_fallthru
          _
        %s550 = sadd.s32 %s36, %s37
        %s551 = smul.u32 %s550, 8
        %v552 = vlaneseq
        %v553 = vshrl.u32 %v552, 7
        %v554 = vstv %s551
        %v555 = vadd.s32 %v554, %v553
        %vm556 = vcmp.lt.s32.totalorder %v555, 8
        %v557 = vld [vmem:[%s419] sm:$0xff]
        %v558 = vld [vmem:[%s429] sm:$0xff]
        %vm559 = vcmask 523264
        %v560 = vsel %vm559, %v557, -inf
        %561 = vmax.xlane.f32.xlu0 %v560
        %v562 = vpop.xlane.xlu0 %561
        %v563 = vsub.f32 %v557, %v562
        %v564 = vmul.f32 %v563, 1.442695
        %v565 = vpow.pop %v564
        %v566 = vsel %vm559, %v565, 0.0
        %567 = vadd.xlane.f32.xlu0 %v566
        %v568 = vpop.xlane.xlu0 %567
        %v569 = vlog2.pop %v568
        %v570 = vmul.f32 %v569, 0.6931472
        %v571 = vadd.f32 %v570, %v562
        %v572 = vsel %vm559, %v558, 0.0
        %573 = vadd.xlane.f32.xlu0 %v572
        %v574 = vpop.xlane.xlu0 %573
        %v575 = vmul.f32 %v558, %v557
        %v576 = vsel %vm559, %v575, 0.0
        %577 = vadd.xlane.f32.xlu0 %v576
        %v578 = vpop.xlane.xlu0 %577
        %v579 = vmul.f32 %v571, %v574
        %v580 = vsub.f32 %v579, %v578
        %v581 = vld [vmem:[#allocation2] sm:$0xff]
        %v582 = vsel %vm556, %v580, 0.0
        %v583 = vadd.f32 %v581, %v582
        %vm584 = vcmask 7168
        %585 = vst.msk [vmem:[#allocation2] sm:$0xff] %vm584, %v583
        %v586 = vld [vmem:[%s439] sm:$0xff]
        %v587 = vld [vmem:[%s449] sm:$0xff]
        %v588 = vsel %vm559, %v586, -inf
        %589 = vmax.xlane.f32.xlu0 %v588
        %v590 = vpop.xlane.xlu0 %589
        %v591 = vsub.f32 %v586, %v590
        %v592 = vmul.f32 %v591, 1.442695
        %v593 = vpow.pop %v592
        %v594 = vsel %vm559, %v593, 0.0
        %595 = vadd.xlane.f32.xlu0 %v594
        %v596 = vpop.xlane.xlu0 %595
        %v597 = vlog2.pop %v596
        %v598 = vmul.f32 %v597, 0.6931472
        %v599 = vadd.f32 %v598, %v590
        %v600 = vsel %vm559, %v587, 0.0
        %601 = vadd.xlane.f32.xlu0 %v600
        %v602 = vpop.xlane.xlu0 %601
        %v603 = vmul.f32 %v587, %v586
        %v604 = vsel %vm559, %v603, 0.0
        %605 = vadd.xlane.f32.xlu0 %v604
        %v606 = vpop.xlane.xlu0 %605
        %v607 = vmul.f32 %v599, %v602
        %v608 = vsub.f32 %v607, %v606
        %s609 = scalar_lea.vmem [#allocation2], 8
        %v610 = vld [vmem:[%s609] sm:$0xff]
        %v611 = vsel %vm556, %v608, 0.0
        %v612 = vadd.f32 %v610, %v611
        %613 = vst.msk [vmem:[%s609] sm:$0xff] %vm584, %v612
        %v614 = vld [vmem:[%s459] sm:$0xff]
        %v615 = vld [vmem:[%s469] sm:$0xff]
        %v616 = vsel %vm559, %v614, -inf
        %617 = vmax.xlane.f32.xlu0 %v616
        %v618 = vpop.xlane.xlu0 %617
        %v619 = vsub.f32 %v614, %v618
        %v620 = vmul.f32 %v619, 1.442695
        %v621 = vpow.pop %v620
        %v622 = vsel %vm559, %v621, 0.0
        %623 = vadd.xlane.f32.xlu0 %v622
        %v624 = vpop.xlane.xlu0 %623
        %v625 = vlog2.pop %v624
        %v626 = vmul.f32 %v625, 0.6931472
        %v627 = vadd.f32 %v626, %v618
        %v628 = vsel %vm559, %v615, 0.0
        %629 = vadd.xlane.f32.xlu0 %v628
        %v630 = vpop.xlane.xlu0 %629
        %v631 = vmul.f32 %v615, %v614
        %v632 = vsel %vm559, %v631, 0.0
        %633 = vadd.xlane.f32.xlu0 %v632
        %v634 = vpop.xlane.xlu0 %633
        %v635 = vmul.f32 %v627, %v630
        %v636 = vsub.f32 %v635, %v634
        %s637 = scalar_lea.vmem [#allocation2], 16
        %v638 = vld [vmem:[%s637] sm:$0xff]
        %v639 = vsel %vm556, %v636, 0.0
        %v640 = vadd.f32 %v638, %v639
        %641 = vst.msk [vmem:[%s637] sm:$0xff] %vm584, %v640
        // Predicated region
        $region73: #{tpu_custom_call.1} parent=43 // pred_check
          %p642 = pneg %p542
        $region74: #{tpu_custom_call.1} parent=43 // pred_check_branch
          %644 = sbr.rel (%p642) target = $region76
        $region75: #{tpu_custom_call.1} parent=43 // pred_region
          %vm645 = vcmp.eq.s32.totalorder %v553, 0
          %v646 = vld [vmem:[#allocation2] sm:$0xff]
          %v647 = vsel %vm584, %v646, 0.0
          %648 = vadd.xlane.f32.xlu0 %v647
          %v649 = vpop.xlane.xlu0 %648
          %v650 = vrot.slane %v649, 4
          %v651 = vadd.f32 %v649, %v650
          %v652 = vrot.slane %v651, 2
          %v653 = vadd.f32 %v651, %v652
          %v654 = vrot.slane %v653, 1
          %v655 = vadd.f32 %v653, %v654
          %s656 = vtos %v655
          %s657 = smul.f32 %s656, 0.125
          %v658 = vstv %s657
          %v659 = vsel %vm645, %v658, 0.0
          %vm660 = vcmp.eq.s32.totalorder %v553, 1
          %v661 = vld [vmem:[%s609] sm:$0xff]
          %v662 = vsel %vm584, %v661, 0.0
          %663 = vadd.xlane.f32.xlu0 %v662
          %v664 = vpop.xlane.xlu0 %663
          %v665 = vrot.slane %v664, 4
          %v666 = vadd.f32 %v664, %v665
          %v667 = vrot.slane %v666, 2
          %v668 = vadd.f32 %v666, %v667
          %v669 = vrot.slane %v668, 1
          %v670 = vadd.f32 %v668, %v669
          %s671 = vtos %v670
          %s672 = smul.f32 %s671, 0.125
          %v673 = vstv %s672
          %v674 = vsel %vm660, %v673, %v659
          %vm675 = vcmp.eq.s32.totalorder %v553, 2
          %v676 = vld [vmem:[%s637] sm:$0xff]
          %v677 = vsel %vm584, %v676, 0.0
          %678 = vadd.xlane.f32.xlu0 %v677
          %v679 = vpop.xlane.xlu0 %678
          %v680 = vrot.slane %v679, 4
          %v681 = vadd.f32 %v679, %v680
          %v682 = vrot.slane %v681, 2
          %v683 = vadd.f32 %v681, %v682
          %v684 = vrot.slane %v683, 1
          %v685 = vadd.f32 %v683, %v684
          %s686 = vtos %v685
          %s687 = smul.f32 %s686, 0.125
          %v688 = vstv %s687
          %v689 = vsel %vm675, %v688, %v674
          %690 = vst [vmem:[%s523] sm:$0xff] %v689
        $region76: #{tpu_custom_call.1} parent=43 // pred_fallthru
          _
        %s691 = sand.u32 %s244, 1
        %s692 = scalar_lea.sflag [#allocation5], %s691
        %s693 = sand.u32 %s244, 1
        %s694 = smul.addr %s693, 8
        %s695 = scalar_lea.vmem [#allocation14], %s694
        // Predicated region
        $region77: #{tpu_custom_call.1} parent=43 // pred_check
          %p696 = pneg %p254
        $region78: #{tpu_custom_call.1} parent=43 // pred_check_branch
          %698 = sbr.rel (%p696) target = $region80
        $region79: #{tpu_custom_call.1} parent=43 // pred_region
          %700 = vsyncadd %s692, 0
          %s701 = smul.addr %s36, 8
          %s702 = scalar_lea.hbm %s6, %s701
          %s704 = sshll.u32 %s695, 4
          %s705 = int_to_ptr.vmem [resolvable:$true] %s704
          %s706 = sshll.u32 %s702, 4
          %s707 = int_to_ptr.hbm [resolvable:$true] %s706
          %709 = dma.vmem_to_hbm [thread:$0]  %s705, 128, %s707, %s692
        $region80: #{tpu_custom_call.1} parent=43 // pred_fallthru
          _
      $region44: #{tpu_custom_call.1} parent=5 // pred_fallthru
        _
      %p710 = scmp.le.s32.totalorder 2, %s27
      // Predicated region
      $region81: #{tpu_custom_call.1} parent=5 // pred_check
        %p711 = pneg %p710
      $region82: #{tpu_custom_call.1} parent=5 // pred_check_branch
        %713 = sbr.rel (%p711) target = $region84
      $region83: #{tpu_custom_call.1} parent=5 // pred_region
        %s714 = ssub.s32 %s27, 2
        // Predicated region
        $region85: #{tpu_custom_call.1} parent=83 // pred_check
          %p715 = pneg %p260
        $region86: #{tpu_custom_call.1} parent=83 // pred_check_branch
          %717 = sbr.rel (%p715) target = $region88
        $region87: #{tpu_custom_call.1} parent=83 // pred_region
          %s718 = sand.u32 %s245, 1
          %s719 = scalar_lea.sflag [#allocation5], %s718
          %s720 = sand.u32 %s245, 1
          %s721 = smul.addr %s720, 8
          %s722 = scalar_lea.vmem [#allocation14], %s721
          %724 = dma.done %s719, 128
        $region88: #{tpu_custom_call.1} parent=83 // pred_fallthru
          _
      $region84: #{tpu_custom_call.1} parent=5 // pred_fallthru
        _
    $region6: #{tpu_custom_call.1} parent=1 // loop_footer
      %s31 = sadd.s32 1, %s27
    $region7: #{tpu_custom_call.1} parent=1 // loop_footer_branch
      %26 = sbr.rel target = $region3
    $region8: #{tpu_custom_call.1} parent=1 // loop_exit
      _
    %725 = vsyncpa [#allocation4], 1
    %s726 = scalar_lea.sflag [#allocation4], 1
    %727 = vsyncpa %s726, 1
    %728 = vsyncpa [#allocation7], 1
    %s729 = scalar_lea.sflag [#allocation7], 1
    %730 = vsyncpa %s729, 1
    %731 = vsyncpa [#allocation10], 1
    %s732 = scalar_lea.sflag [#allocation10], 1
    %733 = vsyncpa %s732, 1
    %734 = vsyncpa [#allocation13], 1
    %s735 = scalar_lea.sflag [#allocation13], 1
    %736 = vsyncpa %s735, 1
    %737 = vsyncpa [#allocation5], 1
    %s738 = scalar_lea.sflag [#allocation5], 1
    %739 = vsyncpa %s738, 1

</llo_original>
